<compile_context>
chip_gen: v5e
topology: v5e:2x2
jax: 0.10.0
libtpu: 0.0.40
codegen_flags: <defaults>
</compile_context>

<pallas_src>
import functools

import numpy as np
import jax
import jax.numpy as jnp
from jax.experimental import pallas as pl
from jax.experimental.pallas import tpu as pltpu

AR = 3        # autoregressive order (module default)
HID = 16      # hidden width of the tuner MLP


# --------------------------------------------------------------------------- kernel
def tuner_kernel(inp_ref,            # VMEM (2*AR + 2, T): rows 0..2*AR-1 = MLP input,
                                     #                     rows 2*AR..2*AR+1 = last angles
                 w1_ref, b1_ref,     # (16, 2*AR + 2) zero-padded, (16, 1)
                 w2_ref, b2_ref,     # (16, 16),   (16, 1)
                 w3_ref, b3_ref,     # (16, 16),   (16, 1)
                 w4_ref, b4_ref,     # (2, 16),    (2, 1)
                 out_ref,            # VMEM (4, T) rows = [x1, y1, x2, y2]
                 *, scale, ar):      # scale = 2*pi*a (compile-time fold)
    inp = inp_ref[...]                                                 # (2*ar+2, T)
    # Layer 1 consumes the full packed tile; padded weight columns are zero,
    # so the `last` rows contribute nothing -> numerically identical.
    h = jnp.tanh(jnp.dot(w1_ref[...], inp,
                         preferred_element_type=jnp.float32) + b1_ref[...])
    h = jnp.tanh(jnp.dot(w2_ref[...], h,
                         preferred_element_type=jnp.float32) + b2_ref[...])
    h = jnp.tanh(jnp.dot(w3_ref[...], h,
                         preferred_element_type=jnp.float32) + b3_ref[...])
    d = jnp.tanh(jnp.dot(w4_ref[...], h,
                         preferred_element_type=jnp.float32) + b4_ref[...])

    last = inp[2 * ar:2 * ar + 2, :]                                   # (2, T)
    ang = last + scale * d                                             # (2, T)

    c = jnp.cos(ang)                                                   # (2, T)
    s = jnp.sin(ang)                                                   # (2, T)
    x1 = c[0:1, :]
    y1 = s[0:1, :]
    out_ref[0:1, :] = x1                       # dense lane-major row stores
    out_ref[1:2, :] = y1
    out_ref[2:3, :] = c[1:2, :] + x1
    out_ref[3:4, :] = s[1:2, :] + y1


# --------------------------------------------------------------------------- wrapper
def init_params(key, ar=AR, hid=HID):
    """nn.Linear-style params: W [out, in], b [out], U(-1/sqrt(in), 1/sqrt(in))."""
    sizes = [(hid, 2 * ar), (hid, hid), (hid, hid), (2, hid)]
    params = []
    for i, (fo, fi) in enumerate(sizes):
        kw, kb = jax.random.split(jax.random.fold_in(key, i))
        bound = 1.0 / np.sqrt(fi)
        w = jax.random.uniform(kw, (fo, fi), jnp.float32, -bound, bound)
        b = jax.random.uniform(kb, (fo,), jnp.float32, -bound, bound)
        params += [w, b]
    return params


def _choose_tile(n):
    # Largest lane tile <= n (amortizes the ~0.35us per-grid-step overhead);
    # VMEM at the biggest tile: (8 + 4) rows * 65536 * 4B * 2 buffers ~= 6.3 MiB.
    for t in (65536, 32768, 16384, 8192, 4096, 2048, 1024, 512, 256, 128):
        if n >= t:
            return t
    return 128


def tuner_angles_v1_forward(x, params, a=1.0, ar=AR):
    """x: [4, ar, N] float32 (coord axis {x1,y1,x2,y2}). Returns pred: [4, N]."""
    x = x.astype(jnp.float32)
    n = x.shape[-1]

    # ---- angle extraction (np.angle(re + i*im) == arctan2(im, re)) : XLA glue
    ang1 = jnp.arctan2(x[1], x[0])                       # [ar, N]
    ang2 = jnp.arctan2(x[3] - x[1], x[2] - x[0])         # [ar, N]
    angles = jnp.stack([ang1, ang2], axis=0)             # [2, ar, N]

    # exact module semantics: row-major reshape [2, ar, N] -> [N, 2*ar],
    # presented lane-major ([features, N]) for the kernel, packed together
    # with the "last" angles into one sublane-aligned (2*ar + 2, N) slab.
    mlp_in = jnp.reshape(angles, (-1, 2 * ar)).T         # [2*ar, N]
    last = angles[:, -1, :]                              # [2, N]
    inp = jnp.concatenate([mlp_in, last], axis=0)        # [2*ar + 2, N]
    rows_in = 2 * ar + 2

    # ---- pad N to a lane-aligned tile multiple (full lane occupancy, dense vst)
    tile_n = _choose_tile(n)
    n_pad = pl.cdiv(n, tile_n) * tile_n
    if n_pad != n:
        inp = jnp.pad(inp, ((0, 0), (0, n_pad - n)))

    w1, b1, w2, b2, w3, b3, w4, b4 = params
    col = lambda b: b.reshape(-1, 1)                     # [out] -> [out, 1]
    # zero-pad W1 [16, 2*ar] -> [16, 2*ar+2] so layer 1 eats the packed tile.
    w1p = jnp.concatenate(
        [w1.astype(jnp.float32), jnp.zeros((w1.shape[0], 2), jnp.float32)], axis=1)

    scale = float(2.0 * np.pi * a)                       # fold 2*pi and `a`
    kernel = functools.partial(tuner_kernel, scale=scale, ar=ar)

    tiled = lambda rows: pl.BlockSpec((rows, tile_n), lambda i: (0, i))
    resident = lambda arr: pl.BlockSpec(arr.shape, lambda i: (0, 0))  # VMEM resident

    out = pl.pallas_call(
        kernel,
        out_shape=jax.ShapeDtypeStruct((4, n_pad), jnp.float32),
        grid=(n_pad // tile_n,),
        in_specs=[
            tiled(rows_in),                              # packed MLP input + last angles
            resident(w1p), resident(col(b1)),
            resident(w2), resident(col(b2)),
            resident(w3), resident(col(b3)),
            resident(w4), resident(col(b4)),
        ],
        out_specs=tiled(4),
        compiler_params=pltpu.CompilerParams(
            dimension_semantics=("parallel",),           # megacore-shard N on v7x
            vmem_limit_bytes=32 * 1024 * 1024,
        ),
    )(inp, w1p, col(b1), w2, col(b2), w3, col(b3), w4, col(b4))

    return out[:, :n]                                    # [4, N]


# --------------------------------------------------------------------------- reference (pure JAX)
def reference_forward(x, params, a=1.0, ar=AR):
    x = x.astype(jnp.float32)
    ang1 = jnp.arctan2(x[1], x[0])
    ang2 = jnp.arctan2(x[3] - x[1], x[2] - x[0])
    angles = jnp.stack([ang1, ang2], axis=0)             # [2, ar, N]
    h = jnp.reshape(angles, (-1, 2 * ar))                # [N, 2*ar]
    w1, b1, w2, b2, w3, b3, w4, b4 = params
    h = jnp.tanh(h @ w1.T + b1)
    h = jnp.tanh(h @ w2.T + b2)
    h = jnp.tanh(h @ w3.T + b3)
    d = jnp.tanh(h @ w4.T + b4) * 2.0 * jnp.pi           # [N, 2]
    pred_ang = angles[:, -1, :] + a * d.T                # [2, N]
    x1 = jnp.cos(pred_ang[0]); y1 = jnp.sin(pred_ang[0])
    x2 = jnp.cos(pred_ang[1]) + x1; y2 = jnp.sin(pred_ang[1]) + y1
    return jnp.stack([x1, y1, x2, y2])                   # [4, N]


# --------------------------------------------------------------------------- main
if __name__ == "__main__":
    N = 300  # number of samples (not a multiple of 128, exercises padding + grid>1)
    key = jax.random.PRNGKey(0)
    x = jax.random.normal(key, (4, AR, N), dtype=jnp.float32)

    params = init_params(jax.random.PRNGKey(42))

    pred = jax.block_until_ready(tuner_angles_v1_forward(x, params, a=1.0))
    ref = jax.block_until_ready(reference_forward(x, params, a=1.0))

    assert pred.shape == (4, N)
    np.testing.assert_allclose(np.asarray(pred), np.asarray(ref),
                               rtol=3e-5, atol=3e-5)
    print("KERNEL_OK")
</pallas_src>

<mosaic_0001>
module attributes {stable_mosaic.version = 11 : i64} {
  func.func @tuner_kernel(%arg0: i32, %arg1: memref<8x256xf32, #tpu.memory_space<vmem>>, %arg2: memref<16x8xf32, #tpu.memory_space<vmem>>, %arg3: memref<16x1xf32, #tpu.memory_space<vmem>>, %arg4: memref<16x16xf32, #tpu.memory_space<vmem>>, %arg5: memref<16x1xf32, #tpu.memory_space<vmem>>, %arg6: memref<16x16xf32, #tpu.memory_space<vmem>>, %arg7: memref<16x1xf32, #tpu.memory_space<vmem>>, %arg8: memref<2x16xf32, #tpu.memory_space<vmem>>, %arg9: memref<2x1xf32, #tpu.memory_space<vmem>>, %arg10: memref<4x256xf32, #tpu.memory_space<vmem>>) attributes {dimension_semantics = [#tpu.dimension_semantics<parallel>], iteration_bounds = array<i64: 2>, scalar_prefetch = 0 : i64, scratch_operands = 0 : i64, tpu.core_type = #tpu.core_type<tc>, window_params = [{transform_indices = @transform_0, window_bounds = array<i64: 8, 256>}, {pipeline_mode = #tpu.pipeline_mode<synchronous>, transform_indices = @transform_1, window_bounds = array<i64: 16, 8>}, {pipeline_mode = #tpu.pipeline_mode<synchronous>, transform_indices = @transform_2, window_bounds = array<i64: 16, 1>}, {pipeline_mode = #tpu.pipeline_mode<synchronous>, transform_indices = @transform_3, window_bounds = array<i64: 16, 16>}, {pipeline_mode = #tpu.pipeline_mode<synchronous>, transform_indices = @transform_4, window_bounds = array<i64: 16, 1>}, {pipeline_mode = #tpu.pipeline_mode<synchronous>, transform_indices = @transform_5, window_bounds = array<i64: 16, 16>}, {pipeline_mode = #tpu.pipeline_mode<synchronous>, transform_indices = @transform_6, window_bounds = array<i64: 16, 1>}, {pipeline_mode = #tpu.pipeline_mode<synchronous>, transform_indices = @transform_7, window_bounds = array<i64: 2, 16>}, {pipeline_mode = #tpu.pipeline_mode<synchronous>, transform_indices = @transform_8, window_bounds = array<i64: 2, 1>}, {transform_indices = @transform_9, window_bounds = array<i64: 4, 256>}]} {
    %c0 = arith.constant 0 : index
    %c0_0 = arith.constant 0 : index
    %0 = vector.load %arg1[%c0, %c0_0] : memref<8x256xf32, #tpu.memory_space<vmem>>, vector<8x256xf32>
    %c0_1 = arith.constant 0 : index
    %c0_2 = arith.constant 0 : index
    %1 = vector.load %arg2[%c0_1, %c0_2] : memref<16x8xf32, #tpu.memory_space<vmem>>, vector<16x8xf32>
    %cst = arith.constant dense<0.000000e+00> : vector<16x256xf32>
    %2 = tpu.matmul %1, %0, %cst {dimension_numbers = #tpu.dot_dimension_numbers<[1], [0], [0], [1], [0, 0, 1, 1], [], []>} : vector<16x8xf32>, vector<8x256xf32>, vector<16x256xf32> -> vector<16x256xf32>
    %c0_3 = arith.constant 0 : index
    %c0_4 = arith.constant 0 : index
    %3 = vector.load %arg3[%c0_3, %c0_4] : memref<16x1xf32, #tpu.memory_space<vmem>>, vector<16x1xf32>
    %4 = vector.broadcast %3 : vector<16x1xf32> to vector<16x256xf32>
    %5 = arith.addf %2, %4 : vector<16x256xf32>
    %6 = math.tanh %5 : vector<16x256xf32>
    %c0_5 = arith.constant 0 : index
    %c0_6 = arith.constant 0 : index
    %7 = vector.load %arg4[%c0_5, %c0_6] : memref<16x16xf32, #tpu.memory_space<vmem>>, vector<16x16xf32>
    %cst_7 = arith.constant dense<0.000000e+00> : vector<16x256xf32>
    %8 = tpu.matmul %7, %6, %cst_7 {dimension_numbers = #tpu.dot_dimension_numbers<[1], [0], [0], [1], [0, 0, 1, 1], [], []>} : vector<16x16xf32>, vector<16x256xf32>, vector<16x256xf32> -> vector<16x256xf32>
    %c0_8 = arith.constant 0 : index
    %c0_9 = arith.constant 0 : index
    %9 = vector.load %arg5[%c0_8, %c0_9] : memref<16x1xf32, #tpu.memory_space<vmem>>, vector<16x1xf32>
    %10 = vector.broadcast %9 : vector<16x1xf32> to vector<16x256xf32>
    %11 = arith.addf %8, %10 : vector<16x256xf32>
    %12 = math.tanh %11 : vector<16x256xf32>
    %c0_10 = arith.constant 0 : index
    %c0_11 = arith.constant 0 : index
    %13 = vector.load %arg6[%c0_10, %c0_11] : memref<16x16xf32, #tpu.memory_space<vmem>>, vector<16x16xf32>
    %cst_12 = arith.constant dense<0.000000e+00> : vector<16x256xf32>
    %14 = tpu.matmul %13, %12, %cst_12 {dimension_numbers = #tpu.dot_dimension_numbers<[1], [0], [0], [1], [0, 0, 1, 1], [], []>} : vector<16x16xf32>, vector<16x256xf32>, vector<16x256xf32> -> vector<16x256xf32>
    %c0_13 = arith.constant 0 : index
    %c0_14 = arith.constant 0 : index
    %15 = vector.load %arg7[%c0_13, %c0_14] : memref<16x1xf32, #tpu.memory_space<vmem>>, vector<16x1xf32>
    %16 = vector.broadcast %15 : vector<16x1xf32> to vector<16x256xf32>
    %17 = arith.addf %14, %16 : vector<16x256xf32>
    %18 = math.tanh %17 : vector<16x256xf32>
    %c0_15 = arith.constant 0 : index
    %c0_16 = arith.constant 0 : index
    %19 = vector.load %arg8[%c0_15, %c0_16] : memref<2x16xf32, #tpu.memory_space<vmem>>, vector<2x16xf32>
    %cst_17 = arith.constant dense<0.000000e+00> : vector<2x256xf32>
    %20 = tpu.matmul %19, %18, %cst_17 {dimension_numbers = #tpu.dot_dimension_numbers<[1], [0], [0], [1], [0, 0, 1, 1], [], []>} : vector<2x16xf32>, vector<16x256xf32>, vector<2x256xf32> -> vector<2x256xf32>
    %c0_18 = arith.constant 0 : index
    %c0_19 = arith.constant 0 : index
    %21 = vector.load %arg9[%c0_18, %c0_19] : memref<2x1xf32, #tpu.memory_space<vmem>>, vector<2x1xf32>
    %22 = vector.broadcast %21 : vector<2x1xf32> to vector<2x256xf32>
    %23 = arith.addf %20, %22 : vector<2x256xf32>
    %24 = math.tanh %23 : vector<2x256xf32>
    %25 = vector.extract_strided_slice %0 {offsets = [6, 0], sizes = [2, 256], strides = [1, 1]} : vector<8x256xf32> to vector<2x256xf32>
    %cst_20 = arith.constant 6.28318548 : f32
    %26 = vector.broadcast %cst_20 : f32 to vector<2x256xf32>
    %27 = arith.mulf %26, %24 : vector<2x256xf32>
    %28 = arith.addf %25, %27 : vector<2x256xf32>
    %29 = math.cos %28 : vector<2x256xf32>
    %30 = math.sin %28 : vector<2x256xf32>
    %31 = vector.extract_strided_slice %29 {offsets = [0, 0], sizes = [1, 256], strides = [1, 1]} : vector<2x256xf32> to vector<1x256xf32>
    %32 = vector.extract_strided_slice %30 {offsets = [0, 0], sizes = [1, 256], strides = [1, 1]} : vector<2x256xf32> to vector<1x256xf32>
    %c0_21 = arith.constant 0 : index
    %c0_22 = arith.constant 0 : index
    %33 = vector.load %arg10[%c0_21, %c0_22] : memref<4x256xf32, #tpu.memory_space<vmem>>, vector<1x256xf32>
    tpu.vector_store %arg10[%c0_21, %c0_22], %31 {strides = array<i32>} : memref<4x256xf32, #tpu.memory_space<vmem>>, vector<1x256xf32>,
    %c1 = arith.constant 1 : index
    %c0_23 = arith.constant 0 : index
    %34 = vector.load %arg10[%c1, %c0_23] : memref<4x256xf32, #tpu.memory_space<vmem>>, vector<1x256xf32>
    tpu.vector_store %arg10[%c1, %c0_23], %32 {strides = array<i32>} : memref<4x256xf32, #tpu.memory_space<vmem>>, vector<1x256xf32>,
    %35 = vector.extract_strided_slice %29 {offsets = [1, 0], sizes = [1, 256], strides = [1, 1]} : vector<2x256xf32> to vector<1x256xf32>
    %36 = arith.addf %35, %31 : vector<1x256xf32>
    %c2 = arith.constant 2 : index
    %c0_24 = arith.constant 0 : index
    %37 = vector.load %arg10[%c2, %c0_24] : memref<4x256xf32, #tpu.memory_space<vmem>>, vector<1x256xf32>
    tpu.vector_store %arg10[%c2, %c0_24], %36 {strides = array<i32>} : memref<4x256xf32, #tpu.memory_space<vmem>>, vector<1x256xf32>,
    %38 = vector.extract_strided_slice %30 {offsets = [1, 0], sizes = [1, 256], strides = [1, 1]} : vector<2x256xf32> to vector<1x256xf32>
    %39 = arith.addf %38, %32 : vector<1x256xf32>
    %c3 = arith.constant 3 : index
    %c0_25 = arith.constant 0 : index
    %40 = vector.load %arg10[%c3, %c0_25] : memref<4x256xf32, #tpu.memory_space<vmem>>, vector<1x256xf32>
    tpu.vector_store %arg10[%c3, %c0_25], %39 {strides = array<i32>} : memref<4x256xf32, #tpu.memory_space<vmem>>, vector<1x256xf32>,
    return
  }
  func.func @transform_0(%arg0: i32) -> (i32, i32) {
    %c0_i32 = arith.constant 0 : i32
    %c0_i32_0 = arith.constant 0 : i32
    return %c0_i32, %arg0 : i32, i32
  }
  func.func @transform_1(%arg0: i32) -> (i32, i32) {
    %c0_i32 = arith.constant 0 : i32
    %c0_i32_0 = arith.constant 0 : i32
    %c0_i32_1 = arith.constant 0 : i32
    return %c0_i32, %c0_i32_0 : i32, i32
  }
  func.func @transform_2(%arg0: i32) -> (i32, i32) {
    %c0_i32 = arith.constant 0 : i32
    %c0_i32_0 = arith.constant 0 : i32
    %c0_i32_1 = arith.constant 0 : i32
    return %c0_i32, %c0_i32_0 : i32, i32
  }
  func.func @transform_3(%arg0: i32) -> (i32, i32) {
    %c0_i32 = arith.constant 0 : i32
    %c0_i32_0 = arith.constant 0 : i32
    %c0_i32_1 = arith.constant 0 : i32
    return %c0_i32, %c0_i32_0 : i32, i32
  }
  func.func @transform_4(%arg0: i32) -> (i32, i32) {
    %c0_i32 = arith.constant 0 : i32
    %c0_i32_0 = arith.constant 0 : i32
    %c0_i32_1 = arith.constant 0 : i32
    return %c0_i32, %c0_i32_0 : i32, i32
  }
  func.func @transform_5(%arg0: i32) -> (i32, i32) {
    %c0_i32 = arith.constant 0 : i32
    %c0_i32_0 = arith.constant 0 : i32
    %c0_i32_1 = arith.constant 0 : i32
    return %c0_i32, %c0_i32_0 : i32, i32
  }
  func.func @transform_6(%arg0: i32) -> (i32, i32) {
    %c0_i32 = arith.constant 0 : i32
    %c0_i32_0 = arith.constant 0 : i32
    %c0_i32_1 = arith.constant 0 : i32
    return %c0_i32, %c0_i32_0 : i32, i32
  }
  func.func @transform_7(%arg0: i32) -> (i32, i32) {
    %c0_i32 = arith.constant 0 : i32
    %c0_i32_0 = arith.constant 0 : i32
    %c0_i32_1 = arith.constant 0 : i32
    return %c0_i32, %c0_i32_0 : i32, i32
  }
  func.func @transform_8(%arg0: i32) -> (i32, i32) {
    %c0_i32 = arith.constant 0 : i32
    %c0_i32_0 = arith.constant 0 : i32
    %c0_i32_1 = arith.constant 0 : i32
    return %c0_i32, %c0_i32_0 : i32, i32
  }
  func.func @transform_9(%arg0: i32) -> (i32, i32) {
    %c0_i32 = arith.constant 0 : i32
    %c0_i32_0 = arith.constant 0 : i32
    return %c0_i32, %arg0 : i32, i32
  }
}

</mosaic_0001>

<llo_original>
// kernel: tpu_custom_call.1
$region0: #{tpu_custom_call.1}
  #allocation0 [shape = 'u32[]', space=smem, size = 0x4, offset = 0x4, fixed_abs, tag = 'smem constant byte address 0x4 - core index']
  #allocation1 [shape = 'u32[72,128]{1,0:T(1,128)}', space=vmem, size = 0x9000, scoped, tag = 'internal scratch']
  %s0 = inlined_call_operand.vmem [shape: f32[8,512], index: 0, kind: input, shape index: {}]
  %s1 = inlined_call_operand.vmem [shape: f32[16,8], index: 1, kind: input, shape index: {}]
  %s2 = inlined_call_operand.vmem [shape: f32[16,1], index: 2, kind: input, shape index: {}]
  %s3 = inlined_call_operand.vmem [shape: f32[16,16], index: 3, kind: input, shape index: {}]
  %s4 = inlined_call_operand.vmem [shape: f32[16,1], index: 4, kind: input, shape index: {}]
  %s5 = inlined_call_operand.vmem [shape: f32[16,16], index: 5, kind: input, shape index: {}]
  %s6 = inlined_call_operand.vmem [shape: f32[16,1], index: 6, kind: input, shape index: {}]
  %s7 = inlined_call_operand.vmem [shape: f32[2,16], index: 7, kind: input, shape index: {}]
  %s8 = inlined_call_operand.vmem [shape: f32[2,1], index: 8, kind: input, shape index: {}]
  %s9 = inlined_call_operand.hbm [shape: f32[4,512], index: 9, kind: output, shape index: {}]
  %s10 = sld [smem:[#allocation0]]
  $region69: #{tpu_custom_call.1} parent=0
    _
  %s12 = ssub.s32 1, %s10
  %s13 = scalar_select 0, %s12, %s10
  $region1: #{tpu_custom_call.1} parent=0
    #allocation2 [shape = 'u8[8192]{0}', space=vmem, size = 0x2000, scoped, tag = 'output window, operand 0']
    #allocation3 [shape = 's32[2]{0}', space=sflag, size = 0x8, scoped, tag = 'scoped memory for tpu_custom_call.1']
    %14 = vsyncpa [#allocation3], 0
    %s15 = scalar_lea.sflag [#allocation3], 1
    %16 = vsyncpa %s15, 0
    loop: start=0, step=1, limit=4
    $region2: #{tpu_custom_call.1} parent=1 // loop_pre_header
      _
    $region3: #{tpu_custom_call.1} parent=1 // loop_header
      %s18 = sphi 0, %s22
      %p19 = scmp.ge.s32.totalorder %s18, 4
      %s28 = sphi 0, %s30
      %s31 = sphi 0, %s28
      %s32 = sphi 0, %s31
      %s48 = sphi 0, %s32
      %s52 = sphi 0, %s52
      %s54 = sphi 0, %s52
      %s55 = sphi 0, %s54
      %s69 = sphi 0, %s55
      %s73 = sphi 0, %s73
      %s75 = sphi 0, %s73
      %s76 = sphi 0, %s75
      %s90 = sphi 0, %s76
      %s94 = sphi 0, %s94
      %s96 = sphi 0, %s94
      %s97 = sphi 0, %s96
      %s111 = sphi 0, %s97
      %s115 = sphi 0, %s115
      %s117 = sphi 0, %s115
      %s118 = sphi 0, %s117
      %s132 = sphi 0, %s118
      %s136 = sphi 0, %s136
      %s138 = sphi 0, %s136
      %s139 = sphi 0, %s138
      %s153 = sphi 0, %s139
      %s157 = sphi 0, %s157
      %s159 = sphi 0, %s157
      %s160 = sphi 0, %s159
      %s174 = sphi 0, %s160
      %s178 = sphi 0, %s178
      %s180 = sphi 0, %s178
      %s181 = sphi 0, %s180
      %s195 = sphi 0, %s181
      %s199 = sphi 0, %s199
      %s201 = sphi 0, %s199
      %s202 = sphi 0, %s201
      %s216 = sphi 0, %s202
      %s222 = sphi 0, %s224
      %s225 = sphi 0, %s222
      %s226 = sphi 0, %s225
      %s242 = sphi 0, %s226
    $region4: #{tpu_custom_call.1} parent=1 // loop_header_branch
      %21 = sbr.rel (%p19) target = $region8
    $region5: #{tpu_custom_call.1} parent=1 // loop_body
      %s23 = ssub.s32 %s18, 1
      %s24 = ssub.s32 %s18, 2
      %s25 = sadd.s32 %s18, 1
      %s26 = ssub.s32 %s18, %s25
      %p27 = scmp.eq.s32.totalorder %s26, 0
      %s29 = sadd.s32 %s28, 1
      %s30 = scalar_select %p27, %s28, %s29
      %p33 = pneg %p27
      %p34 = scmp.eq.s32.totalorder %s18, 1
      %p35 = por %p33, %p34
      %p36 = scmp.ne.s32.totalorder %s28, %s31
      %p37 = scmp.eq.s32.totalorder %s18, 0
      %p38 = por %p36, %p37
      %p39 = scmp.ne.s32.totalorder %s28, %s31
      %p40 = scmp.eq.s32.totalorder %s23, 1
      %p41 = por %p39, %p40
      %p42 = scmp.ne.s32.totalorder %s31, %s32
      %p43 = scmp.eq.s32.totalorder %s23, 0
      %p44 = por %p42, %p43
      %p45 = scmp.ne.s32.totalorder %s31, %s32
      %p46 = scmp.eq.s32.totalorder %s24, 1
      %p47 = por %p45, %p46
      %p49 = scmp.ne.s32.totalorder %s32, %s48
      %p50 = scmp.eq.s32.totalorder %s24, 0
      %p51 = por %p49, %p50
      %s53 = sadd.s32 %s52, 1
      %p56 = scmp.eq.s32.totalorder %s18, 1
      %p57 = scmp.ne.s32.totalorder %s52, %s54
      %p58 = scmp.eq.s32.totalorder %s18, 0
      %p59 = por %p57, %p58
      %p60 = scmp.ne.s32.totalorder %s52, %s54
      %p61 = scmp.eq.s32.totalorder %s23, 1
      %p62 = por %p60, %p61
      %p63 = scmp.ne.s32.totalorder %s54, %s55
      %p64 = scmp.eq.s32.totalorder %s23, 0
      %p65 = por %p63, %p64
      %p66 = scmp.ne.s32.totalorder %s54, %s55
      %p67 = scmp.eq.s32.totalorder %s24, 1
      %p68 = por %p66, %p67
      %p70 = scmp.ne.s32.totalorder %s55, %s69
      %p71 = scmp.eq.s32.totalorder %s24, 0
      %p72 = por %p70, %p71
      %s74 = sadd.s32 %s73, 1
      %p77 = scmp.eq.s32.totalorder %s18, 1
      %p78 = scmp.ne.s32.totalorder %s73, %s75
      %p79 = scmp.eq.s32.totalorder %s18, 0
      %p80 = por %p78, %p79
      %p81 = scmp.ne.s32.totalorder %s73, %s75
      %p82 = scmp.eq.s32.totalorder %s23, 1
      %p83 = por %p81, %p82
      %p84 = scmp.ne.s32.totalorder %s75, %s76
      %p85 = scmp.eq.s32.totalorder %s23, 0
      %p86 = por %p84, %p85
      %p87 = scmp.ne.s32.totalorder %s75, %s76
      %p88 = scmp.eq.s32.totalorder %s24, 1
      %p89 = por %p87, %p88
      %p91 = scmp.ne.s32.totalorder %s76, %s90
      %p92 = scmp.eq.s32.totalorder %s24, 0
      %p93 = por %p91, %p92
      %s95 = sadd.s32 %s94, 1
      %p98 = scmp.eq.s32.totalorder %s18, 1
      %p99 = scmp.ne.s32.totalorder %s94, %s96
      %p100 = scmp.eq.s32.totalorder %s18, 0
      %p101 = por %p99, %p100
      %p102 = scmp.ne.s32.totalorder %s94, %s96
      %p103 = scmp.eq.s32.totalorder %s23, 1
      %p104 = por %p102, %p103
      %p105 = scmp.ne.s32.totalorder %s96, %s97
      %p106 = scmp.eq.s32.totalorder %s23, 0
      %p107 = por %p105, %p106
      %p108 = scmp.ne.s32.totalorder %s96, %s97
      %p109 = scmp.eq.s32.totalorder %s24, 1
      %p110 = por %p108, %p109
      %p112 = scmp.ne.s32.totalorder %s97, %s111
      %p113 = scmp.eq.s32.totalorder %s24, 0
      %p114 = por %p112, %p113
      %s116 = sadd.s32 %s115, 1
      %p119 = scmp.eq.s32.totalorder %s18, 1
      %p120 = scmp.ne.s32.totalorder %s115, %s117
      %p121 = scmp.eq.s32.totalorder %s18, 0
      %p122 = por %p120, %p121
      %p123 = scmp.ne.s32.totalorder %s115, %s117
      %p124 = scmp.eq.s32.totalorder %s23, 1
      %p125 = por %p123, %p124
      %p126 = scmp.ne.s32.totalorder %s117, %s118
      %p127 = scmp.eq.s32.totalorder %s23, 0
      %p128 = por %p126, %p127
      %p129 = scmp.ne.s32.totalorder %s117, %s118
      %p130 = scmp.eq.s32.totalorder %s24, 1
      %p131 = por %p129, %p130
      %p133 = scmp.ne.s32.totalorder %s118, %s132
      %p134 = scmp.eq.s32.totalorder %s24, 0
      %p135 = por %p133, %p134
      %s137 = sadd.s32 %s136, 1
      %p140 = scmp.eq.s32.totalorder %s18, 1
      %p141 = scmp.ne.s32.totalorder %s136, %s138
      %p142 = scmp.eq.s32.totalorder %s18, 0
      %p143 = por %p141, %p142
      %p144 = scmp.ne.s32.totalorder %s136, %s138
      %p145 = scmp.eq.s32.totalorder %s23, 1
      %p146 = por %p144, %p145
      %p147 = scmp.ne.s32.totalorder %s138, %s139
      %p148 = scmp.eq.s32.totalorder %s23, 0
      %p149 = por %p147, %p148
      %p150 = scmp.ne.s32.totalorder %s138, %s139
      %p151 = scmp.eq.s32.totalorder %s24, 1
      %p152 = por %p150, %p151
      %p154 = scmp.ne.s32.totalorder %s139, %s153
      %p155 = scmp.eq.s32.totalorder %s24, 0
      %p156 = por %p154, %p155
      %s158 = sadd.s32 %s157, 1
      %p161 = scmp.eq.s32.totalorder %s18, 1
      %p162 = scmp.ne.s32.totalorder %s157, %s159
      %p163 = scmp.eq.s32.totalorder %s18, 0
      %p164 = por %p162, %p163
      %p165 = scmp.ne.s32.totalorder %s157, %s159
      %p166 = scmp.eq.s32.totalorder %s23, 1
      %p167 = por %p165, %p166
      %p168 = scmp.ne.s32.totalorder %s159, %s160
      %p169 = scmp.eq.s32.totalorder %s23, 0
      %p170 = por %p168, %p169
      %p171 = scmp.ne.s32.totalorder %s159, %s160
      %p172 = scmp.eq.s32.totalorder %s24, 1
      %p173 = por %p171, %p172
      %p175 = scmp.ne.s32.totalorder %s160, %s174
      %p176 = scmp.eq.s32.totalorder %s24, 0
      %p177 = por %p175, %p176
      %s179 = sadd.s32 %s178, 1
      %p182 = scmp.eq.s32.totalorder %s18, 1
      %p183 = scmp.ne.s32.totalorder %s178, %s180
      %p184 = scmp.eq.s32.totalorder %s18, 0
      %p185 = por %p183, %p184
      %p186 = scmp.ne.s32.totalorder %s178, %s180
      %p187 = scmp.eq.s32.totalorder %s23, 1
      %p188 = por %p186, %p187
      %p189 = scmp.ne.s32.totalorder %s180, %s181
      %p190 = scmp.eq.s32.totalorder %s23, 0
      %p191 = por %p189, %p190
      %p192 = scmp.ne.s32.totalorder %s180, %s181
      %p193 = scmp.eq.s32.totalorder %s24, 1
      %p194 = por %p192, %p193
      %p196 = scmp.ne.s32.totalorder %s181, %s195
      %p197 = scmp.eq.s32.totalorder %s24, 0
      %p198 = por %p196, %p197
      %s200 = sadd.s32 %s199, 1
      %p203 = scmp.eq.s32.totalorder %s18, 1
      %p204 = scmp.ne.s32.totalorder %s199, %s201
      %p205 = scmp.eq.s32.totalorder %s18, 0
      %p206 = por %p204, %p205
      %p207 = scmp.ne.s32.totalorder %s199, %s201
      %p208 = scmp.eq.s32.totalorder %s23, 1
      %p209 = por %p207, %p208
      %p210 = scmp.ne.s32.totalorder %s201, %s202
      %p211 = scmp.eq.s32.totalorder %s23, 0
      %p212 = por %p210, %p211
      %p213 = scmp.ne.s32.totalorder %s201, %s202
      %p214 = scmp.eq.s32.totalorder %s24, 1
      %p215 = por %p213, %p214
      %p217 = scmp.ne.s32.totalorder %s202, %s216
      %p218 = scmp.eq.s32.totalorder %s24, 0
      %p219 = por %p217, %p218
      %s220 = ssub.s32 %s18, %s25
      %p221 = scmp.eq.s32.totalorder %s220, 0
      %s223 = sadd.s32 %s222, 1
      %s224 = scalar_select %p221, %s222, %s223
      %p227 = pneg %p221
      %p228 = scmp.eq.s32.totalorder %s18, 1
      %p229 = por %p227, %p228
      %p230 = scmp.ne.s32.totalorder %s222, %s225
      %p231 = scmp.eq.s32.totalorder %s18, 0
      %p232 = por %p230, %p231
      %p233 = scmp.ne.s32.totalorder %s222, %s225
      %p234 = scmp.eq.s32.totalorder %s23, 1
      %p235 = por %p233, %p234
      %p236 = scmp.ne.s32.totalorder %s225, %s226
      %p237 = scmp.eq.s32.totalorder %s23, 0
      %p238 = por %p236, %p237
      %p239 = scmp.ne.s32.totalorder %s225, %s226
      %p240 = scmp.eq.s32.totalorder %s24, 1
      %p241 = por %p239, %p240
      %p243 = scmp.ne.s32.totalorder %s226, %s242
      %p244 = scmp.eq.s32.totalorder %s24, 0
      %p245 = por %p243, %p244
      %p246 = scmp.le.s32.totalorder 1, %s18
      %p247 = scmp.lt.s32.totalorder %s18, 3
      %p248 = pnand %p246, %p247
      %p249 = pneg %p248
      // Predicated region
      $region9: #{tpu_custom_call.1} parent=5 // pred_check
        _
      $region10: #{tpu_custom_call.1} parent=5 // pred_check_branch
        %251 = sbr.rel (%p248) target = $region12
      $region11: #{tpu_custom_call.1} parent=5 // pred_region
        %s252 = ssub.s32 %s18, 1
        // Predicated region
        $region13: #{tpu_custom_call.1} parent=11 // pred_check
          %p253 = pneg %p65
        $region14: #{tpu_custom_call.1} parent=11 // pred_check_branch
          %255 = sbr.rel (%p253) target = $region16
        $region15: #{tpu_custom_call.1} parent=11 // pred_region
          _
        $region16: #{tpu_custom_call.1} parent=11 // pred_fallthru
          _
        // Predicated region
        $region17: #{tpu_custom_call.1} parent=11 // pred_check
          %p256 = pneg %p86
        $region18: #{tpu_custom_call.1} parent=11 // pred_check_branch
          %258 = sbr.rel (%p256) target = $region20
        $region19: #{tpu_custom_call.1} parent=11 // pred_region
          _
        $region20: #{tpu_custom_call.1} parent=11 // pred_fallthru
          _
        // Predicated region
        $region21: #{tpu_custom_call.1} parent=11 // pred_check
          %p259 = pneg %p107
        $region22: #{tpu_custom_call.1} parent=11 // pred_check_branch
          %261 = sbr.rel (%p259) target = $region24
        $region23: #{tpu_custom_call.1} parent=11 // pred_region
          _
        $region24: #{tpu_custom_call.1} parent=11 // pred_fallthru
          _
        // Predicated region
        $region25: #{tpu_custom_call.1} parent=11 // pred_check
          %p262 = pneg %p128
        $region26: #{tpu_custom_call.1} parent=11 // pred_check_branch
          %264 = sbr.rel (%p262) target = $region28
        $region27: #{tpu_custom_call.1} parent=11 // pred_region
          _
        $region28: #{tpu_custom_call.1} parent=11 // pred_fallthru
          _
        // Predicated region
        $region29: #{tpu_custom_call.1} parent=11 // pred_check
          %p265 = pneg %p149
        $region30: #{tpu_custom_call.1} parent=11 // pred_check_branch
          %267 = sbr.rel (%p265) target = $region32
        $region31: #{tpu_custom_call.1} parent=11 // pred_region
          _
        $region32: #{tpu_custom_call.1} parent=11 // pred_fallthru
          _
        // Predicated region
        $region33: #{tpu_custom_call.1} parent=11 // pred_check
          %p268 = pneg %p170
        $region34: #{tpu_custom_call.1} parent=11 // pred_check_branch
          %270 = sbr.rel (%p268) target = $region36
        $region35: #{tpu_custom_call.1} parent=11 // pred_region
          _
        $region36: #{tpu_custom_call.1} parent=11 // pred_fallthru
          _
        // Predicated region
        $region37: #{tpu_custom_call.1} parent=11 // pred_check
          %p271 = pneg %p191
        $region38: #{tpu_custom_call.1} parent=11 // pred_check_branch
          %273 = sbr.rel (%p271) target = $region40
        $region39: #{tpu_custom_call.1} parent=11 // pred_region
          _
        $region40: #{tpu_custom_call.1} parent=11 // pred_fallthru
          _
        // Predicated region
        $region41: #{tpu_custom_call.1} parent=11 // pred_check
          %p274 = pneg %p212
        $region42: #{tpu_custom_call.1} parent=11 // pred_check_branch
          %276 = sbr.rel (%p274) target = $region44
        $region43: #{tpu_custom_call.1} parent=11 // pred_region
          _
        $region44: #{tpu_custom_call.1} parent=11 // pred_fallthru
          _
      $region12: #{tpu_custom_call.1} parent=5 // pred_fallthru
        _
      %p277 = scmp.lt.s32.totalorder %s18, 2
      // Predicated region
      $region45: #{tpu_custom_call.1} parent=5 // pred_check
        %p278 = pneg %p277
      $region46: #{tpu_custom_call.1} parent=5 // pred_check_branch
        %280 = sbr.rel (%p278) target = $region48
      $region47: #{tpu_custom_call.1} parent=5 // pred_region
        // Predicated region
        $region49: #{tpu_custom_call.1} parent=47 // pred_check
          %p281 = pneg %p38
        $region50: #{tpu_custom_call.1} parent=47 // pred_check_branch
          %283 = sbr.rel (%p281) target = $region52
        $region51: #{tpu_custom_call.1} parent=47 // pred_region
          %s284 = smul.u32 2, %s18
          %p285 = scmp.lt.s32.totalorder %s284, 3
          %s286 = scalar_select %p285, %s284, 3
          %s287 = smul.addr %s286, 8
          %s288 = scalar_lea.vmem %s0, %s287
          %s289 = smul.u32 2, %s18
        $region52: #{tpu_custom_call.1} parent=47 // pred_fallthru
          _
      $region48: #{tpu_custom_call.1} parent=5 // pred_fallthru
        _
      %p290 = scmp.le.s32.totalorder 1, %s18
      %p291 = scmp.lt.s32.totalorder %s18, 3
      %p292 = pnand %p290, %p291
      %p293 = pneg %p292
      // Predicated region
      $region53: #{tpu_custom_call.1} parent=5 // pred_check
        _
      $region54: #{tpu_custom_call.1} parent=5 // pred_check_branch
        %295 = sbr.rel (%p292) target = $region56
      $region55: #{tpu_custom_call.1} parent=5 // pred_region
        %s296 = ssub.s32 %s18, 1
        %s297 = smul.u32 2, %s23
        %p298 = scmp.lt.s32.totalorder %s297, 3
        %s299 = scalar_select %p298, %s297, 3
        %s300 = smul.addr %s299, 8
        %s301 = scalar_lea.vmem %s0, %s300
        %p302 = pneg %p44
        %p303 = pneg %p41
        %p304 = pneg %p65
        %p305 = pneg %p62
        %p306 = pneg %p86
        %p307 = pneg %p83
        %p308 = pneg %p107
        %p309 = pneg %p104
        %p310 = pneg %p128
        %p311 = pneg %p125
        %p312 = pneg %p149
        %p313 = pneg %p146
        %p314 = pneg %p170
        %p315 = pneg %p167
        %p316 = pneg %p191
        %p317 = pneg %p188
        %p318 = pneg %p212
        %p319 = pneg %p209
        %p320 = pneg %p238
        %p321 = pneg %p235
        %s322 = sand.u32 %s225, 1
        %s323 = scalar_lea.sflag [#allocation3], %s322
        %s324 = sand.u32 %s225, 1
        %s325 = smul.addr %s324, 8
        %s326 = scalar_lea.vmem [#allocation2], %s325
        %s327 = smul.u32 2, %s23
        %p328 = scmp.lt.s32.totalorder %s327, 3
        %s329 = scalar_select %p328, %s327, 3
        %s330 = smul.addr %s329, 8
        %s331 = scalar_lea.vmem %s0, %s330
        %s332 = smul.u32 2, %s23
        %s333 = smul.u32 2, %s23
        %v334 = vld [vmem:[%s331] sm:$0xff]
        %v335 = vld [vmem:[%s331 + $0x8] sm:$0xff]
        %v336 = vld [vmem:[%s1] sm:$0xff]
        %v337 = vld [vmem:[%s1 + $0x8] sm:$0xff]
        %v338 = vld [vmem:[%s2] sm:$0xff]
        %v339 = vld [vmem:[%s2 + $0x8] sm:$0xff]
        %341 = vset.pattern.permute.xlu0 0
        %342 = vperm.xlu0 %341, %v338
        %v343 = vpop.permute.xlu0 %342
        %346 = vset.pattern.permute.xlu0 0
        %347 = vperm.xlu0 %346, %v339
        %v348 = vpop.permute.xlu0 %347
        %vm350 = vcmask 64512
        %v352 = vsel %vm350, %v336, 0
        %v355 = vsel %vm350, %v337, 0
        %357 = vmatpush.msra.mxu0 0.0
        %358 = vmatpush.msra.mxu0 0.0
        %359 = vmatpush.msra.mxu0 0.0
        %360 = vmatpush.msra.mxu0 0.0
        %361 = vmatpush.msra.mxu0 0.0
        %362 = vmatpush.msra.mxu0 0.0
        %363 = vmatpush.msra.mxu0 0.0
        %364 = vmatpush.msra.mxu0 0.0
        %365 = vmatpush.msra.mxu0 0.0
        %366 = vmatpush.msra.mxu0 0.0
        %367 = vmatpush.msra.mxu0 0.0
        %368 = vmatpush.msra.mxu0 0.0
        %369 = vmatpush.msra.mxu0 0.0
        %370 = vmatpush.msra.mxu0 0.0
        %371 = vmatpush.msra.mxu0 0.0
        %372 = vmatpush.msra.mxu0 %v334
        %373 = vmatmul.f32.gmra.mxu0 %v352
        %v374 = vpop.f32.mrf.mxu0
        %v375 = vadd.f32 %v343, %v374
        %376 = vmatmul.f32.gmra.mxu0 %v355
        %v377 = vpop.f32.mrf.mxu0
        %v378 = vadd.f32 %v348, %v377
        %379 = vdwg.mxu0
        %380 = vmatpush.msra.mxu0 0.0
        %381 = vmatpush.msra.mxu0 0.0
        %382 = vmatpush.msra.mxu0 0.0
        %383 = vmatpush.msra.mxu0 0.0
        %384 = vmatpush.msra.mxu0 0.0
        %385 = vmatpush.msra.mxu0 0.0
        %386 = vmatpush.msra.mxu0 0.0
        %387 = vmatpush.msra.mxu0 0.0
        %388 = vmatpush.msra.mxu0 0.0
        %389 = vmatpush.msra.mxu0 0.0
        %390 = vmatpush.msra.mxu0 0.0
        %391 = vmatpush.msra.mxu0 0.0
        %392 = vmatpush.msra.mxu0 0.0
        %393 = vmatpush.msra.mxu0 0.0
        %394 = vmatpush.msra.mxu0 0.0
        %395 = vmatpush.msra.mxu0 %v335
        %396 = vmatmul.f32.gmra.mxu0 %v352
        %v397 = vpop.f32.mrf.mxu0
        %v398 = vadd.f32 %v343, %v397
        %399 = vmatmul.f32.gmra.mxu0 %v355
        %v400 = vpop.f32.mrf.mxu0
        %v401 = vadd.f32 %v348, %v400
        %402 = vdwg.mxu0
        %v403 = vtanh.pop %v375
        %v404 = vtanh.pop %v398
        %v405 = vtanh.pop %v378
        %v406 = vtanh.pop %v401
        %v407 = vld [vmem:[%s3] sm:$0xff]
        %v408 = vld [vmem:[%s3 + $0x8] sm:$0xff]
        %v409 = vld [vmem:[%s4] sm:$0xff]
        %v410 = vld [vmem:[%s4 + $0x8] sm:$0xff]
        %412 = vset.pattern.permute.xlu0 0
        %413 = vperm.xlu0 %412, %v409
        %v414 = vpop.permute.xlu0 %413
        %417 = vset.pattern.permute.xlu0 0
        %418 = vperm.xlu0 %417, %v410
        %v419 = vpop.permute.xlu0 %418
        %vm421 = vcmask 130048
        %v423 = vsel %vm421, %v407, 0
        %v426 = vsel %vm421, %v408, 0
        %428 = vmatpush.msra.mxu0 0.0
        %429 = vmatpush.msra.mxu0 0.0
        %430 = vmatpush.msra.mxu0 0.0
        %431 = vmatpush.msra.mxu0 0.0
        %432 = vmatpush.msra.mxu0 0.0
        %433 = vmatpush.msra.mxu0 0.0
        %434 = vmatpush.msra.mxu0 0.0
        %435 = vmatpush.msra.mxu0 0.0
        %436 = vmatpush.msra.mxu0 0.0
        %437 = vmatpush.msra.mxu0 0.0
        %438 = vmatpush.msra.mxu0 0.0
        %439 = vmatpush.msra.mxu0 0.0
        %440 = vmatpush.msra.mxu0 0.0
        %441 = vmatpush.msra.mxu0 0.0
        %442 = vmatpush.msra.mxu0 %v405
        %443 = vmatpush.msra.mxu0 %v403
        %444 = vmatmul.f32.gmra.mxu0 %v423
        %v445 = vpop.f32.mrf.mxu0
        %v446 = vadd.f32 %v414, %v445
        %447 = vmatmul.f32.gmra.mxu0 %v426
        %v448 = vpop.f32.mrf.mxu0
        %v449 = vadd.f32 %v419, %v448
        %450 = vdwg.mxu0
        %451 = vmatpush.msra.mxu0 0.0
        %452 = vmatpush.msra.mxu0 0.0
        %453 = vmatpush.msra.mxu0 0.0
        %454 = vmatpush.msra.mxu0 0.0
        %455 = vmatpush.msra.mxu0 0.0
        %456 = vmatpush.msra.mxu0 0.0
        %457 = vmatpush.msra.mxu0 0.0
        %458 = vmatpush.msra.mxu0 0.0
        %459 = vmatpush.msra.mxu0 0.0
        %460 = vmatpush.msra.mxu0 0.0
        %461 = vmatpush.msra.mxu0 0.0
        %462 = vmatpush.msra.mxu0 0.0
        %463 = vmatpush.msra.mxu0 0.0
        %464 = vmatpush.msra.mxu0 0.0
        %465 = vmatpush.msra.mxu0 %v406
        %466 = vmatpush.msra.mxu0 %v404
        %467 = vmatmul.f32.gmra.mxu0 %v423
        %v468 = vpop.f32.mrf.mxu0
        %v469 = vadd.f32 %v414, %v468
        %470 = vmatmul.f32.gmra.mxu0 %v426
        %v471 = vpop.f32.mrf.mxu0
        %v472 = vadd.f32 %v419, %v471
        %473 = vdwg.mxu0
        %v474 = vtanh.pop %v446
        %v475 = vtanh.pop %v469
        %v476 = vtanh.pop %v449
        %v477 = vtanh.pop %v472
        %v478 = vld [vmem:[%s5] sm:$0xff]
        %v479 = vld [vmem:[%s5 + $0x8] sm:$0xff]
        %v480 = vld [vmem:[%s6] sm:$0xff]
        %v481 = vld [vmem:[%s6 + $0x8] sm:$0xff]
        %483 = vset.pattern.permute.xlu0 0
        %484 = vperm.xlu0 %483, %v480
        %v485 = vpop.permute.xlu0 %484
        %488 = vset.pattern.permute.xlu0 0
        %489 = vperm.xlu0 %488, %v481
        %v490 = vpop.permute.xlu0 %489
        %v493 = vsel %vm421, %v478, 0
        %v496 = vsel %vm421, %v479, 0
        %498 = vmatpush.msra.mxu0 0.0
        %499 = vmatpush.msra.mxu0 0.0
        %500 = vmatpush.msra.mxu0 0.0
        %501 = vmatpush.msra.mxu0 0.0
        %502 = vmatpush.msra.mxu0 0.0
        %503 = vmatpush.msra.mxu0 0.0
        %504 = vmatpush.msra.mxu0 0.0
        %505 = vmatpush.msra.mxu0 0.0
        %506 = vmatpush.msra.mxu0 0.0
        %507 = vmatpush.msra.mxu0 0.0
        %508 = vmatpush.msra.mxu0 0.0
        %509 = vmatpush.msra.mxu0 0.0
        %510 = vmatpush.msra.mxu0 0.0
        %511 = vmatpush.msra.mxu0 0.0
        %512 = vmatpush.msra.mxu0 %v476
        %513 = vmatpush.msra.mxu0 %v474
        %514 = vmatmul.f32.gmra.mxu0 %v493
        %v515 = vpop.f32.mrf.mxu0
        %v516 = vadd.f32 %v485, %v515
        %517 = vmatmul.f32.gmra.mxu0 %v496
        %v518 = vpop.f32.mrf.mxu0
        %v519 = vadd.f32 %v490, %v518
        %520 = vdwg.mxu0
        %521 = vmatpush.msra.mxu0 0.0
        %522 = vmatpush.msra.mxu0 0.0
        %523 = vmatpush.msra.mxu0 0.0
        %524 = vmatpush.msra.mxu0 0.0
        %525 = vmatpush.msra.mxu0 0.0
        %526 = vmatpush.msra.mxu0 0.0
        %527 = vmatpush.msra.mxu0 0.0
        %528 = vmatpush.msra.mxu0 0.0
        %529 = vmatpush.msra.mxu0 0.0
        %530 = vmatpush.msra.mxu0 0.0
        %531 = vmatpush.msra.mxu0 0.0
        %532 = vmatpush.msra.mxu0 0.0
        %533 = vmatpush.msra.mxu0 0.0
        %534 = vmatpush.msra.mxu0 0.0
        %535 = vmatpush.msra.mxu0 %v477
        %536 = vmatpush.msra.mxu0 %v475
        %537 = vmatmul.f32.gmra.mxu0 %v493
        %v538 = vpop.f32.mrf.mxu0
        %v539 = vadd.f32 %v485, %v538
        %540 = vmatmul.f32.gmra.mxu0 %v496
        %v541 = vpop.f32.mrf.mxu0
        %v542 = vadd.f32 %v490, %v541
        %543 = vdwg.mxu0
        %v544 = vtanh.pop %v516
        %v545 = vtanh.pop %v539
        %v546 = vtanh.pop %v519
        %v547 = vtanh.pop %v542
        %v548 = vld [vmem:[%s7] sm:$0x3]
        %v549 = vld [vmem:[%s8] sm:$0x3]
        %551 = vset.pattern.permute.xlu0 0
        %552 = vperm.xlu0 %551, %v549
        %v553 = vpop.permute.xlu0 %552
        %v556 = vsel %vm421, %v548, 0
        %558 = vmatpush.msra.mxu0 0.0
        %559 = vmatpush.msra.mxu0 0.0
        %560 = vmatpush.msra.mxu0 0.0
        %561 = vmatpush.msra.mxu0 0.0
        %562 = vmatpush.msra.mxu0 0.0
        %563 = vmatpush.msra.mxu0 0.0
        %564 = vmatpush.msra.mxu0 0.0
        %565 = vmatpush.msra.mxu0 0.0
        %566 = vmatpush.msra.mxu0 0.0
        %567 = vmatpush.msra.mxu0 0.0
        %568 = vmatpush.msra.mxu0 0.0
        %569 = vmatpush.msra.mxu0 0.0
        %570 = vmatpush.msra.mxu0 0.0
        %571 = vmatpush.msra.mxu0 0.0
        %572 = vmatpush.msra.mxu0 %v546
        %573 = vmatpush.msra.mxu0 %v544
        %574 = vmatmul.f32.gmra.mxu0 %v556
        %v575 = vpop.f32.mrf.mxu0
        %v576 = vadd.f32 %v553, %v575
        %577 = vdwg.mxu0
        %578 = vmatpush.msra.mxu0 0.0
        %579 = vmatpush.msra.mxu0 0.0
        %580 = vmatpush.msra.mxu0 0.0
        %581 = vmatpush.msra.mxu0 0.0
        %582 = vmatpush.msra.mxu0 0.0
        %583 = vmatpush.msra.mxu0 0.0
        %584 = vmatpush.msra.mxu0 0.0
        %585 = vmatpush.msra.mxu0 0.0
        %586 = vmatpush.msra.mxu0 0.0
        %587 = vmatpush.msra.mxu0 0.0
        %588 = vmatpush.msra.mxu0 0.0
        %589 = vmatpush.msra.mxu0 0.0
        %590 = vmatpush.msra.mxu0 0.0
        %591 = vmatpush.msra.mxu0 0.0
        %592 = vmatpush.msra.mxu0 %v547
        %593 = vmatpush.msra.mxu0 %v545
        %594 = vmatmul.f32.gmra.mxu0 %v556
        %v595 = vpop.f32.mrf.mxu0
        %v596 = vadd.f32 %v553, %v595
        %597 = vdwg.mxu0
        %v598 = vtanh.pop %v576
        %v599 = vtanh.pop %v596
        %v600 = vmul.f32 %v598, 6.2831855
        %v601 = vmul.f32 %v599, 6.2831855
        %v604 = vrot.slane %v600, 2
        %v605 = vrot.slane %v601, 2
        %v608 = vadd.f32 %v334, %v604
        %v609 = vadd.f32 %v335, %v605
        %v610 = vand.u32 2147483647, %v608
        %vm611 = vcmp.le.f32.partialorder %v610, 0.7853982
        %vm612 = vcmp.lt.s32.totalorder %v608, 0
        %v613 = vand.u32 %v608, 2139095040
        %v614 = vshrl.u32 %v613, 23
        %v615 = vsub.s32 %v614, 127
        %v616 = vand.u32 2147483647, %v608
        %v617 = vand.u32 %v616, 8388607
        %v618 = vor.u32 %v617, 8388608
        %v619 = vsub.s32 0, %v618
        %v620 = vadd.s32 %v615, 1
        %vm621 = vcmp.gt.s32.totalorder %v620, 0
        %v622 = vsel %vm621, %v620, 0
        %v623 = vshrl.u32 %v622, 5
        %v624 = vand.u32 %v622, 31
        %v625 = vsub.s32 32, %v624
        %v626 = vshrl.u32 683565275, %v625
        %v627 = vshll.u32 683565275, %v624
        %v628 = vshrl.u32 2475754826, %v625
        %v629 = vor.u32 %v627, %v628
        %v630 = vshll.u32 2475754826, %v624
        %v631 = vshrl.u32 2131351028, %v625
        %v632 = vor.u32 %v630, %v631
        %v633 = vshll.u32 2131351028, %v624
        %v634 = vshrl.u32 2102212464, %v625
        %v635 = vor.u32 %v633, %v634
        %v636 = vshll.u32 2102212464, %v624
        %v637 = vshrl.u32 920167782, %v625
        %v638 = vor.u32 %v636, %v637
        %v639 = vshll.u32 920167782, %v624
        %v640 = vshrl.u32 1326507024, %v625
        %v641 = vor.u32 %v639, %v640
        %vm642 = vcmp.lt.s32.totalorder %v623, 1
        %vm643 = vcmp.lt.s32.totalorder %v623, 2
        %vm644 = vcmp.lt.s32.totalorder %v623, 3
        %vm645 = vcmp.lt.s32.totalorder %v623, 4
        %v646 = vsel %vm642, %v626, %v629
        %v647 = vsel %vm645, %v635, 2102212464
        %v648 = vsel %vm644, %v632, %v647
        %v649 = vsel %vm643, %v646, %v648
        %v650 = vsel %vm642, %v629, %v632
        %v651 = vsel %vm645, %v638, 920167782
        %v652 = vsel %vm644, %v635, %v651
        %v653 = vsel %vm643, %v650, %v652
        %v654 = vsel %vm642, %v632, %v635
        %v655 = vsel %vm645, %v641, 1326507024
        %v656 = vsel %vm644, %v638, %v655
        %v657 = vsel %vm643, %v654, %v656
        %v658 = vshll.u32 %v618, 8
        %v659 = vand.u32 %v658, 65535
        %v660 = vshrl.u32 %v658, 16
        %v661 = vand.u32 %v657, 65535
        %v662 = vshrl.u32 %v657, 16
        %v663 = vmul.u32 %v659, %v661
        %v664 = vmul.u32 %v659, %v662
        %v665 = vmul.u32 %v660, %v661
        %v666 = vmul.u32 %v660, %v662
        %v667 = vshll.u32 %v664, 16
        %v668 = vshrl.u32 %v664, 16
        %v669 = vshll.u32 %v665, 16
        %v670 = vshrl.u32 %v665, 16
        %vm671 = vc.u32 %v663, %v667
        %v672 = vsel %vm671, 1, 0
        %v673 = vadd.s32 %v663, %v667
        %v674 = vadd.s32 %v666, %v672
        %vm675 = vc.u32 %v673, %v669
        %v676 = vsel %vm675, 1, 0
        %v677 = vadd.s32 %v673, %v669
        %v678 = vadd.s32 %v674, %v676
        %v679 = vadd.s32 %v678, %v668
        %v680 = vadd.s32 %v679, %v670
        %v681 = vand.u32 %v658, 65535
        %v682 = vshrl.u32 %v658, 16
        %v683 = vand.u32 %v653, 65535
        %v684 = vshrl.u32 %v653, 16
        %v685 = vmul.u32 %v681, %v683
        %v686 = vmul.u32 %v681, %v684
        %v687 = vmul.u32 %v682, %v683
        %v688 = vmul.u32 %v682, %v684
        %v689 = vshll.u32 %v686, 16
        %v690 = vshrl.u32 %v686, 16
        %v691 = vshll.u32 %v687, 16
        %v692 = vshrl.u32 %v687, 16
        %vm693 = vc.u32 %v685, %v689
        %v694 = vsel %vm693, 1, 0
        %v695 = vadd.s32 %v685, %v689
        %v696 = vadd.s32 %v688, %v694
        %vm697 = vc.u32 %v695, %v691
        %v698 = vsel %vm697, 1, 0
        %v699 = vadd.s32 %v695, %v691
        %v700 = vadd.s32 %v696, %v698
        %v701 = vadd.s32 %v700, %v690
        %v702 = vadd.s32 %v701, %v692
        %v703 = vmul.u32 %v658, %v649
        %v704 = vadd.s32 %v680, %v699
        %vm705 = vc.u32 %v680, %v699
        %v706 = vadd.s32 %v702, 1
        %v707 = vsel %vm705, %v706, %v702
        %v708 = vadd.s32 %v703, %v707
        %v709 = vadd.s32 %v708, 536870912
        %v710 = vshrl.u32 %v709, 30
        %v711 = vshll.u32 %v710, 30
        %v712 = vsub.s32 %v708, %v711
        %vm713 = vcmp.lt.s32.totalorder %v712, 0
        %v714 = vsub.s32 0, %v712
        %v715 = vsel %vm713, %v714, %v712
        %v716 = vclz %v715
        %v717 = vsub.s32 %v716, 2
        %vm718 = vcmp.gt.s32.totalorder 0, %v717
        %v719 = vsel %vm718, 0, %v717
        %v720 = vsub.s32 32, %v719
        %v721 = vshll.u32 %v712, %v719
        %v722 = vshrl.u32 %v704, %v720
        %v723 = vor.u32 %v721, %v722
        %v724 = vsub.s32 4294967266, %v719
        %v725 = vadd.s32 %v724, 127
        %v726 = vshll.u32 %v725, 23
        %v727 = vor.u32 4788187, %v726
        %v728 = vand.u32 2147483647, %v727
        %v730 = vcvt.s32.f32 %v723
        %v731 = vmul.f32 %v730, %v728
        %v732 = vxor.u32 %v731, 2147483648
        %v733 = vsel %vm612, %v732, %v731
        %v734 = vsub.s32 4, %v710
        %v735 = vsel %vm612, %v734, %v710
        %v736 = vsel %vm611, %v608, %v733
        %v737 = vsel %vm611, 0, %v735
        %v738 = vmul.f32 %v736, %v736
        %v739 = vmul.f32 %v738, -0.001358992
        %v740 = vadd.f32 %v739, 0.041655596
        %v741 = vmul.f32 %v738, %v740
        %v742 = vadd.f32 %v741, -0.4999988
        %v743 = vmul.f32 %v738, %v742
        %v744 = vadd.f32 1.0, %v743
        %v745 = vmul.f32 %v736, %v736
        %v746 = vmul.f32 %v745, -0.00019511016
        %v747 = vadd.f32 %v746, 0.008332121
        %v748 = vmul.f32 %v745, %v747
        %v749 = vadd.f32 %v748, -0.16666654
        %v750 = vmul.f32 %v745, %v749
        %v751 = vadd.f32 %v750, 1.0
        %v752 = vmul.f32 %v751, %v736
        %vm753 = vweird.f32 %v608
        %v754 = vand.u32 %v737, 3
        %vm755 = vcmp.lt.s32.totalorder %v754, 2
        %vm756 = vcmp.eq.s32.totalorder %v754, 0
        %v757 = vxor.u32 %v752, 2147483648
        %v758 = vsel %vm756, %v744, %v757
        %vm759 = vcmp.eq.s32.totalorder %v754, 2
        %v760 = vxor.u32 %v744, 2147483648
        %v761 = vsel %vm759, %v760, %v752
        %v762 = vsel %vm755, %v758, %v761
        %v763 = vsel %vm753, nan, %v762
        %v764 = vand.u32 2147483647, %v609
        %vm765 = vcmp.le.f32.partialorder %v764, 0.7853982
        %vm766 = vcmp.lt.s32.totalorder %v609, 0
        %v767 = vand.u32 %v609, 2139095040
        %v768 = vshrl.u32 %v767, 23
        %v769 = vsub.s32 %v768, 127
        %v770 = vand.u32 2147483647, %v609
        %v771 = vand.u32 %v770, 8388607
        %v772 = vor.u32 %v771, 8388608
        %v773 = vsub.s32 0, %v772
        %v774 = vadd.s32 %v769, 1
        %vm775 = vcmp.gt.s32.totalorder %v774, 0
        %v776 = vsel %vm775, %v774, 0
        %v777 = vshrl.u32 %v776, 5
        %v778 = vand.u32 %v776, 31
        %v779 = vsub.s32 32, %v778
        %v780 = vshrl.u32 683565275, %v779
        %v781 = vshll.u32 683565275, %v778
        %v782 = vshrl.u32 2475754826, %v779
        %v783 = vor.u32 %v781, %v782
        %v784 = vshll.u32 2475754826, %v778
        %v785 = vshrl.u32 2131351028, %v779
        %v786 = vor.u32 %v784, %v785
        %v787 = vshll.u32 2131351028, %v778
        %v788 = vshrl.u32 2102212464, %v779
        %v789 = vor.u32 %v787, %v788
        %v790 = vshll.u32 2102212464, %v778
        %v791 = vshrl.u32 920167782, %v779
        %v792 = vor.u32 %v790, %v791
        %v793 = vshll.u32 920167782, %v778
        %v794 = vshrl.u32 1326507024, %v779
        %v795 = vor.u32 %v793, %v794
        %vm796 = vcmp.lt.s32.totalorder %v777, 1
        %vm797 = vcmp.lt.s32.totalorder %v777, 2
        %vm798 = vcmp.lt.s32.totalorder %v777, 3
        %vm799 = vcmp.lt.s32.totalorder %v777, 4
        %v800 = vsel %vm796, %v780, %v783
        %v801 = vsel %vm799, %v789, 2102212464
        %v802 = vsel %vm798, %v786, %v801
        %v803 = vsel %vm797, %v800, %v802
        %v804 = vsel %vm796, %v783, %v786
        %v805 = vsel %vm799, %v792, 920167782
        %v806 = vsel %vm798, %v789, %v805
        %v807 = vsel %vm797, %v804, %v806
        %v808 = vsel %vm796, %v786, %v789
        %v809 = vsel %vm799, %v795, 1326507024
        %v810 = vsel %vm798, %v792, %v809
        %v811 = vsel %vm797, %v808, %v810
        %v812 = vshll.u32 %v772, 8
        %v813 = vand.u32 %v812, 65535
        %v814 = vshrl.u32 %v812, 16
        %v815 = vand.u32 %v811, 65535
        %v816 = vshrl.u32 %v811, 16
        %v817 = vmul.u32 %v813, %v815
        %v818 = vmul.u32 %v813, %v816
        %v819 = vmul.u32 %v814, %v815
        %v820 = vmul.u32 %v814, %v816
        %v821 = vshll.u32 %v818, 16
        %v822 = vshrl.u32 %v818, 16
        %v823 = vshll.u32 %v819, 16
        %v824 = vshrl.u32 %v819, 16
        %vm825 = vc.u32 %v817, %v821
        %v826 = vsel %vm825, 1, 0
        %v827 = vadd.s32 %v817, %v821
        %v828 = vadd.s32 %v820, %v826
        %vm829 = vc.u32 %v827, %v823
        %v830 = vsel %vm829, 1, 0
        %v831 = vadd.s32 %v827, %v823
        %v832 = vadd.s32 %v828, %v830
        %v833 = vadd.s32 %v832, %v822
        %v834 = vadd.s32 %v833, %v824
        %v835 = vand.u32 %v812, 65535
        %v836 = vshrl.u32 %v812, 16
        %v837 = vand.u32 %v807, 65535
        %v838 = vshrl.u32 %v807, 16
        %v839 = vmul.u32 %v835, %v837
        %v840 = vmul.u32 %v835, %v838
        %v841 = vmul.u32 %v836, %v837
        %v842 = vmul.u32 %v836, %v838
        %v843 = vshll.u32 %v840, 16
        %v844 = vshrl.u32 %v840, 16
        %v845 = vshll.u32 %v841, 16
        %v846 = vshrl.u32 %v841, 16
        %vm847 = vc.u32 %v839, %v843
        %v848 = vsel %vm847, 1, 0
        %v849 = vadd.s32 %v839, %v843
        %v850 = vadd.s32 %v842, %v848
        %vm851 = vc.u32 %v849, %v845
        %v852 = vsel %vm851, 1, 0
        %v853 = vadd.s32 %v849, %v845
        %v854 = vadd.s32 %v850, %v852
        %v855 = vadd.s32 %v854, %v844
        %v856 = vadd.s32 %v855, %v846
        %v857 = vmul.u32 %v812, %v803
        %v858 = vadd.s32 %v834, %v853
        %vm859 = vc.u32 %v834, %v853
        %v860 = vadd.s32 %v856, 1
        %v861 = vsel %vm859, %v860, %v856
        %v862 = vadd.s32 %v857, %v861
        %v863 = vadd.s32 %v862, 536870912
        %v864 = vshrl.u32 %v863, 30
        %v865 = vshll.u32 %v864, 30
        %v866 = vsub.s32 %v862, %v865
        %vm867 = vcmp.lt.s32.totalorder %v866, 0
        %v868 = vsub.s32 0, %v866
        %v869 = vsel %vm867, %v868, %v866
        %v870 = vclz %v869
        %v871 = vsub.s32 %v870, 2
        %vm872 = vcmp.gt.s32.totalorder 0, %v871
        %v873 = vsel %vm872, 0, %v871
        %v874 = vsub.s32 32, %v873
        %v875 = vshll.u32 %v866, %v873
        %v876 = vshrl.u32 %v858, %v874
        %v877 = vor.u32 %v875, %v876
        %v878 = vsub.s32 4294967266, %v873
        %v879 = vadd.s32 %v878, 127
        %v880 = vshll.u32 %v879, 23
        %v881 = vor.u32 4788187, %v880
        %v882 = vand.u32 2147483647, %v881
        %v884 = vcvt.s32.f32 %v877
        %v885 = vmul.f32 %v884, %v882
        %v886 = vxor.u32 %v885, 2147483648
        %v887 = vsel %vm766, %v886, %v885
        %v888 = vsub.s32 4, %v864
        %v889 = vsel %vm766, %v888, %v864
        %v890 = vsel %vm765, %v609, %v887
        %v891 = vsel %vm765, 0, %v889
        %v892 = vmul.f32 %v890, %v890
        %v893 = vmul.f32 %v892, -0.001358992
        %v894 = vadd.f32 %v893, 0.041655596
        %v895 = vmul.f32 %v892, %v894
        %v896 = vadd.f32 %v895, -0.4999988
        %v897 = vmul.f32 %v892, %v896
        %v898 = vadd.f32 1.0, %v897
        %v899 = vmul.f32 %v890, %v890
        %v900 = vmul.f32 %v899, -0.00019511016
        %v901 = vadd.f32 %v900, 0.008332121
        %v902 = vmul.f32 %v899, %v901
        %v903 = vadd.f32 %v902, -0.16666654
        %v904 = vmul.f32 %v899, %v903
        %v905 = vadd.f32 %v904, 1.0
        %v906 = vmul.f32 %v905, %v890
        %vm907 = vweird.f32 %v609
        %v908 = vand.u32 %v891, 3
        %vm909 = vcmp.lt.s32.totalorder %v908, 2
        %vm910 = vcmp.eq.s32.totalorder %v908, 0
        %v911 = vxor.u32 %v906, 2147483648
        %v912 = vsel %vm910, %v898, %v911
        %vm913 = vcmp.eq.s32.totalorder %v908, 2
        %v914 = vxor.u32 %v898, 2147483648
        %v915 = vsel %vm913, %v914, %v906
        %v916 = vsel %vm909, %v912, %v915
        %v917 = vsel %vm907, nan, %v916
        %v918 = vand.u32 2147483647, %v608
        %vm919 = vcmp.le.f32.partialorder %v918, 0.7853982
        %vm920 = vcmp.lt.s32.totalorder %v608, 0
        %v921 = vand.u32 %v608, 2139095040
        %v922 = vshrl.u32 %v921, 23
        %v923 = vsub.s32 %v922, 127
        %v924 = vand.u32 2147483647, %v608
        %v925 = vand.u32 %v924, 8388607
        %v926 = vor.u32 %v925, 8388608
        %v927 = vsub.s32 0, %v926
        %v928 = vadd.s32 %v923, 1
        %vm929 = vcmp.gt.s32.totalorder %v928, 0
        %v930 = vsel %vm929, %v928, 0
        %v931 = vshrl.u32 %v930, 5
        %v932 = vand.u32 %v930, 31
        %v933 = vsub.s32 32, %v932
        %v934 = vshrl.u32 683565275, %v933
        %v935 = vshll.u32 683565275, %v932
        %v936 = vshrl.u32 2475754826, %v933
        %v937 = vor.u32 %v935, %v936
        %v938 = vshll.u32 2475754826, %v932
        %v939 = vshrl.u32 2131351028, %v933
        %v940 = vor.u32 %v938, %v939
        %v941 = vshll.u32 2131351028, %v932
        %v942 = vshrl.u32 2102212464, %v933
        %v943 = vor.u32 %v941, %v942
        %v944 = vshll.u32 2102212464, %v932
        %v945 = vshrl.u32 920167782, %v933
        %v946 = vor.u32 %v944, %v945
        %v947 = vshll.u32 920167782, %v932
        %v948 = vshrl.u32 1326507024, %v933
        %v949 = vor.u32 %v947, %v948
        %vm950 = vcmp.lt.s32.totalorder %v931, 1
        %vm951 = vcmp.lt.s32.totalorder %v931, 2
        %vm952 = vcmp.lt.s32.totalorder %v931, 3
        %vm953 = vcmp.lt.s32.totalorder %v931, 4
        %v954 = vsel %vm950, %v934, %v937
        %v955 = vsel %vm953, %v943, 2102212464
        %v956 = vsel %vm952, %v940, %v955
        %v957 = vsel %vm951, %v954, %v956
        %v958 = vsel %vm950, %v937, %v940
        %v959 = vsel %vm953, %v946, 920167782
        %v960 = vsel %vm952, %v943, %v959
        %v961 = vsel %vm951, %v958, %v960
        %v962 = vsel %vm950, %v940, %v943
        %v963 = vsel %vm953, %v949, 1326507024
        %v964 = vsel %vm952, %v946, %v963
        %v965 = vsel %vm951, %v962, %v964
        %v966 = vshll.u32 %v926, 8
        %v967 = vand.u32 %v966, 65535
        %v968 = vshrl.u32 %v966, 16
        %v969 = vand.u32 %v965, 65535
        %v970 = vshrl.u32 %v965, 16
        %v971 = vmul.u32 %v967, %v969
        %v972 = vmul.u32 %v967, %v970
        %v973 = vmul.u32 %v968, %v969
        %v974 = vmul.u32 %v968, %v970
        %v975 = vshll.u32 %v972, 16
        %v976 = vshrl.u32 %v972, 16
        %v977 = vshll.u32 %v973, 16
        %v978 = vshrl.u32 %v973, 16
        %vm979 = vc.u32 %v971, %v975
        %v980 = vsel %vm979, 1, 0
        %v981 = vadd.s32 %v971, %v975
        %v982 = vadd.s32 %v974, %v980
        %vm983 = vc.u32 %v981, %v977
        %v984 = vsel %vm983, 1, 0
        %v985 = vadd.s32 %v981, %v977
        %v986 = vadd.s32 %v982, %v984
        %v987 = vadd.s32 %v986, %v976
        %v988 = vadd.s32 %v987, %v978
        %v989 = vand.u32 %v966, 65535
        %v990 = vshrl.u32 %v966, 16
        %v991 = vand.u32 %v961, 65535
        %v992 = vshrl.u32 %v961, 16
        %v993 = vmul.u32 %v989, %v991
        %v994 = vmul.u32 %v989, %v992
        %v995 = vmul.u32 %v990, %v991
        %v996 = vmul.u32 %v990, %v992
        %v997 = vshll.u32 %v994, 16
        %v998 = vshrl.u32 %v994, 16
        %v999 = vshll.u32 %v995, 16
        %v1000 = vshrl.u32 %v995, 16
        %vm1001 = vc.u32 %v993, %v997
        %v1002 = vsel %vm1001, 1, 0
        %v1003 = vadd.s32 %v993, %v997
        %v1004 = vadd.s32 %v996, %v1002
        %vm1005 = vc.u32 %v1003, %v999
        %v1006 = vsel %vm1005, 1, 0
        %v1007 = vadd.s32 %v1003, %v999
        %v1008 = vadd.s32 %v1004, %v1006
        %v1009 = vadd.s32 %v1008, %v998
        %v1010 = vadd.s32 %v1009, %v1000
        %v1011 = vmul.u32 %v966, %v957
        %v1012 = vadd.s32 %v988, %v1007
        %vm1013 = vc.u32 %v988, %v1007
        %v1014 = vadd.s32 %v1010, 1
        %v1015 = vsel %vm1013, %v1014, %v1010
        %v1016 = vadd.s32 %v1011, %v1015
        %v1017 = vadd.s32 %v1016, 536870912
        %v1018 = vshrl.u32 %v1017, 30
        %v1019 = vshll.u32 %v1018, 30
        %v1020 = vsub.s32 %v1016, %v1019
        %vm1021 = vcmp.lt.s32.totalorder %v1020, 0
        %v1022 = vsub.s32 0, %v1020
        %v1023 = vsel %vm1021, %v1022, %v1020
        %v1024 = vclz %v1023
        %v1025 = vsub.s32 %v1024, 2
        %vm1026 = vcmp.gt.s32.totalorder 0, %v1025
        %v1027 = vsel %vm1026, 0, %v1025
        %v1028 = vsub.s32 32, %v1027
        %v1029 = vshll.u32 %v1020, %v1027
        %v1030 = vshrl.u32 %v1012, %v1028
        %v1031 = vor.u32 %v1029, %v1030
        %v1032 = vsub.s32 4294967266, %v1027
        %v1033 = vadd.s32 %v1032, 127
        %v1034 = vshll.u32 %v1033, 23
        %v1035 = vor.u32 4788187, %v1034
        %v1036 = vand.u32 2147483647, %v1035
        %v1038 = vcvt.s32.f32 %v1031
        %v1039 = vmul.f32 %v1038, %v1036
        %v1040 = vxor.u32 %v1039, 2147483648
        %v1041 = vsel %vm920, %v1040, %v1039
        %v1042 = vsub.s32 4, %v1018
        %v1043 = vsel %vm920, %v1042, %v1018
        %v1044 = vsel %vm919, %v608, %v1041
        %v1045 = vsel %vm919, 0, %v1043
        %v1046 = vmul.f32 %v1044, %v1044
        %v1047 = vmul.f32 %v1046, -0.001358992
        %v1048 = vadd.f32 %v1047, 0.041655596
        %v1049 = vmul.f32 %v1046, %v1048
        %v1050 = vadd.f32 %v1049, -0.4999988
        %v1051 = vmul.f32 %v1046, %v1050
        %v1052 = vadd.f32 1.0, %v1051
        %v1053 = vmul.f32 %v1044, %v1044
        %v1054 = vmul.f32 %v1053, -0.00019511016
        %v1055 = vadd.f32 %v1054, 0.008332121
        %v1056 = vmul.f32 %v1053, %v1055
        %v1057 = vadd.f32 %v1056, -0.16666654
        %v1058 = vmul.f32 %v1053, %v1057
        %v1059 = vadd.f32 %v1058, 1.0
        %v1060 = vmul.f32 %v1059, %v1044
        %vm1061 = vweird.f32 %v608
        %v1062 = vadd.s32 %v1045, 3
        %v1063 = vand.u32 %v1062, 3
        %vm1064 = vcmp.lt.s32.totalorder %v1063, 2
        %vm1065 = vcmp.eq.s32.totalorder %v1063, 0
        %v1066 = vxor.u32 %v1060, 2147483648
        %v1067 = vsel %vm1065, %v1052, %v1066
        %vm1068 = vcmp.eq.s32.totalorder %v1063, 2
        %v1069 = vxor.u32 %v1052, 2147483648
        %v1070 = vsel %vm1068, %v1069, %v1060
        %v1071 = vsel %vm1064, %v1067, %v1070
        %v1072 = vsel %vm1061, nan, %v1071
        %v1073 = vand.u32 2147483647, %v609
        %vm1074 = vcmp.le.f32.partialorder %v1073, 0.7853982
        %vm1075 = vcmp.lt.s32.totalorder %v609, 0
        %v1076 = vand.u32 %v609, 2139095040
        %v1077 = vshrl.u32 %v1076, 23
        %v1078 = vsub.s32 %v1077, 127
        %v1079 = vand.u32 2147483647, %v609
        %v1080 = vand.u32 %v1079, 8388607
        %v1081 = vor.u32 %v1080, 8388608
        %v1082 = vsub.s32 0, %v1081
        %v1083 = vadd.s32 %v1078, 1
        %vm1084 = vcmp.gt.s32.totalorder %v1083, 0
        %v1085 = vsel %vm1084, %v1083, 0
        %v1086 = vshrl.u32 %v1085, 5
        %v1087 = vand.u32 %v1085, 31
        %v1088 = vsub.s32 32, %v1087
        %v1089 = vshrl.u32 683565275, %v1088
        %v1090 = vshll.u32 683565275, %v1087
        %v1091 = vshrl.u32 2475754826, %v1088
        %v1092 = vor.u32 %v1090, %v1091
        %v1093 = vshll.u32 2475754826, %v1087
        %v1094 = vshrl.u32 2131351028, %v1088
        %v1095 = vor.u32 %v1093, %v1094
        %v1096 = vshll.u32 2131351028, %v1087
        %v1097 = vshrl.u32 2102212464, %v1088
        %v1098 = vor.u32 %v1096, %v1097
        %v1099 = vshll.u32 2102212464, %v1087
        %v1100 = vshrl.u32 920167782, %v1088
        %v1101 = vor.u32 %v1099, %v1100
        %v1102 = vshll.u32 920167782, %v1087
        %v1103 = vshrl.u32 1326507024, %v1088
        %v1104 = vor.u32 %v1102, %v1103
        %vm1105 = vcmp.lt.s32.totalorder %v1086, 1
        %vm1106 = vcmp.lt.s32.totalorder %v1086, 2
        %vm1107 = vcmp.lt.s32.totalorder %v1086, 3
        %vm1108 = vcmp.lt.s32.totalorder %v1086, 4
        %v1109 = vsel %vm1105, %v1089, %v1092
        %v1110 = vsel %vm1108, %v1098, 2102212464
        %v1111 = vsel %vm1107, %v1095, %v1110
        %v1112 = vsel %vm1106, %v1109, %v1111
        %v1113 = vsel %vm1105, %v1092, %v1095
        %v1114 = vsel %vm1108, %v1101, 920167782
        %v1115 = vsel %vm1107, %v1098, %v1114
        %v1116 = vsel %vm1106, %v1113, %v1115
        %v1117 = vsel %vm1105, %v1095, %v1098
        %v1118 = vsel %vm1108, %v1104, 1326507024
        %v1119 = vsel %vm1107, %v1101, %v1118
        %v1120 = vsel %vm1106, %v1117, %v1119
        %v1121 = vshll.u32 %v1081, 8
        %v1122 = vand.u32 %v1121, 65535
        %v1123 = vshrl.u32 %v1121, 16
        %v1124 = vand.u32 %v1120, 65535
        %v1125 = vshrl.u32 %v1120, 16
        %v1126 = vmul.u32 %v1122, %v1124
        %v1127 = vmul.u32 %v1122, %v1125
        %v1128 = vmul.u32 %v1123, %v1124
        %v1129 = vmul.u32 %v1123, %v1125
        %v1130 = vshll.u32 %v1127, 16
        %v1131 = vshrl.u32 %v1127, 16
        %v1132 = vshll.u32 %v1128, 16
        %v1133 = vshrl.u32 %v1128, 16
        %vm1134 = vc.u32 %v1126, %v1130
        %v1135 = vsel %vm1134, 1, 0
        %v1136 = vadd.s32 %v1126, %v1130
        %v1137 = vadd.s32 %v1129, %v1135
        %vm1138 = vc.u32 %v1136, %v1132
        %v1139 = vsel %vm1138, 1, 0
        %v1140 = vadd.s32 %v1136, %v1132
        %v1141 = vadd.s32 %v1137, %v1139
        %v1142 = vadd.s32 %v1141, %v1131
        %v1143 = vadd.s32 %v1142, %v1133
        %v1144 = vand.u32 %v1121, 65535
        %v1145 = vshrl.u32 %v1121, 16
        %v1146 = vand.u32 %v1116, 65535
        %v1147 = vshrl.u32 %v1116, 16
        %v1148 = vmul.u32 %v1144, %v1146
        %v1149 = vmul.u32 %v1144, %v1147
        %v1150 = vmul.u32 %v1145, %v1146
        %v1151 = vmul.u32 %v1145, %v1147
        %v1152 = vshll.u32 %v1149, 16
        %v1153 = vshrl.u32 %v1149, 16
        %v1154 = vshll.u32 %v1150, 16
        %v1155 = vshrl.u32 %v1150, 16
        %vm1156 = vc.u32 %v1148, %v1152
        %v1157 = vsel %vm1156, 1, 0
        %v1158 = vadd.s32 %v1148, %v1152
        %v1159 = vadd.s32 %v1151, %v1157
        %vm1160 = vc.u32 %v1158, %v1154
        %v1161 = vsel %vm1160, 1, 0
        %v1162 = vadd.s32 %v1158, %v1154
        %v1163 = vadd.s32 %v1159, %v1161
        %v1164 = vadd.s32 %v1163, %v1153
        %v1165 = vadd.s32 %v1164, %v1155
        %v1166 = vmul.u32 %v1121, %v1112
        %v1167 = vadd.s32 %v1143, %v1162
        %vm1168 = vc.u32 %v1143, %v1162
        %v1169 = vadd.s32 %v1165, 1
        %v1170 = vsel %vm1168, %v1169, %v1165
        %v1171 = vadd.s32 %v1166, %v1170
        %v1172 = vadd.s32 %v1171, 536870912
        %v1173 = vshrl.u32 %v1172, 30
        %v1174 = vshll.u32 %v1173, 30
        %v1175 = vsub.s32 %v1171, %v1174
        %vm1176 = vcmp.lt.s32.totalorder %v1175, 0
        %v1177 = vsub.s32 0, %v1175
        %v1178 = vsel %vm1176, %v1177, %v1175
        %v1179 = vclz %v1178
        %v1180 = vsub.s32 %v1179, 2
        %vm1181 = vcmp.gt.s32.totalorder 0, %v1180
        %v1182 = vsel %vm1181, 0, %v1180
        %v1183 = vsub.s32 32, %v1182
        %v1184 = vshll.u32 %v1175, %v1182
        %v1185 = vshrl.u32 %v1167, %v1183
        %v1186 = vor.u32 %v1184, %v1185
        %v1187 = vsub.s32 4294967266, %v1182
        %v1188 = vadd.s32 %v1187, 127
        %v1189 = vshll.u32 %v1188, 23
        %v1190 = vor.u32 4788187, %v1189
        %v1191 = vand.u32 2147483647, %v1190
        %v1193 = vcvt.s32.f32 %v1186
        %v1194 = vmul.f32 %v1193, %v1191
        %v1195 = vxor.u32 %v1194, 2147483648
        %v1196 = vsel %vm1075, %v1195, %v1194
        %v1197 = vsub.s32 4, %v1173
        %v1198 = vsel %vm1075, %v1197, %v1173
        %v1199 = vsel %vm1074, %v609, %v1196
        %v1200 = vsel %vm1074, 0, %v1198
        %v1201 = vmul.f32 %v1199, %v1199
        %v1202 = vmul.f32 %v1201, -0.001358992
        %v1203 = vadd.f32 %v1202, 0.041655596
        %v1204 = vmul.f32 %v1201, %v1203
        %v1205 = vadd.f32 %v1204, -0.4999988
        %v1206 = vmul.f32 %v1201, %v1205
        %v1207 = vadd.f32 1.0, %v1206
        %v1208 = vmul.f32 %v1199, %v1199
        %v1209 = vmul.f32 %v1208, -0.00019511016
        %v1210 = vadd.f32 %v1209, 0.008332121
        %v1211 = vmul.f32 %v1208, %v1210
        %v1212 = vadd.f32 %v1211, -0.16666654
        %v1213 = vmul.f32 %v1208, %v1212
        %v1214 = vadd.f32 %v1213, 1.0
        %v1215 = vmul.f32 %v1214, %v1199
        %vm1216 = vweird.f32 %v609
        %v1217 = vadd.s32 %v1200, 3
        %v1218 = vand.u32 %v1217, 3
        %vm1219 = vcmp.lt.s32.totalorder %v1218, 2
        %vm1220 = vcmp.eq.s32.totalorder %v1218, 0
        %v1221 = vxor.u32 %v1215, 2147483648
        %v1222 = vsel %vm1220, %v1207, %v1221
        %vm1223 = vcmp.eq.s32.totalorder %v1218, 2
        %v1224 = vxor.u32 %v1207, 2147483648
        %v1225 = vsel %vm1223, %v1224, %v1215
        %v1226 = vsel %vm1219, %v1222, %v1225
        %v1227 = vsel %vm1216, nan, %v1226
        %1230 = vst [vmem:[#allocation1] sm:$0xff] %v763
        %1231 = vst [vmem:[#allocation1 + $0x9] sm:$0xff] %v917
        %s1232 = scalar_lea.vmem [#allocation1], 6
        %v1233 = vld [vmem:[%s1232] ss:$9 sm:$0xff]
        %v1235 = vlaneseq
        %vm1236 = vcmp.ge.s32.totalorder %v1235, 0
        %vm1237 = vcmp.lt.s32.totalorder %v1235, 256
        %vm1238 = vmand %vm1236, %vm1237
        %1239 = vst.msk [vmem:[%s326] ss:$4 sm:$0x3] %vm1238, %v1233
        %1242 = vst [vmem:[#allocation1] sm:$0xff] %v1072
        %1243 = vst [vmem:[#allocation1 + $0x9] sm:$0xff] %v1227
        %s1244 = scalar_lea.vmem [#allocation1], 6
        %v1245 = vld [vmem:[%s1244] ss:$9 sm:$0xff]
        %s1247 = scalar_lea.vmem %s326, 1 [#allocation2]
        %1248 = vst.msk [vmem:[%s1247] ss:$4 sm:$0x3] %vm1238, %v1245
        %v1249 = vrot.slane %v763, 7
        %v1250 = vrot.slane %v917, 7
        %v1253 = vadd.f32 %v763, %v1249
        %v1254 = vadd.f32 %v917, %v1250
        %1257 = vst [vmem:[#allocation1] sm:$0xff] %v1253
        %1258 = vst [vmem:[#allocation1 + $0x9] sm:$0xff] %v1254
        %s1259 = scalar_lea.vmem [#allocation1], 7
        %v1260 = vld [vmem:[%s1259] ss:$9 sm:$0xff]
        %s1262 = scalar_lea.vmem %s326, 2 [#allocation2]
        %1263 = vst.msk [vmem:[%s1262] ss:$4 sm:$0x3] %vm1238, %v1260
        %v1264 = vrot.slane %v1072, 7
        %v1265 = vrot.slane %v1227, 7
        %v1268 = vadd.f32 %v1072, %v1264
        %v1269 = vadd.f32 %v1227, %v1265
        %1272 = vst [vmem:[#allocation1] sm:$0xff] %v1268
        %1273 = vst [vmem:[#allocation1 + $0x9] sm:$0xff] %v1269
        %s1274 = scalar_lea.vmem [#allocation1], 7
        %v1275 = vld [vmem:[%s1274] ss:$9 sm:$0xff]
        %s1277 = scalar_lea.vmem %s326, 3 [#allocation2]
        %1278 = vst.msk [vmem:[%s1277] ss:$4 sm:$0x3] %vm1238, %v1275
        %s1279 = sand.u32 %s225, 1
        %s1280 = scalar_lea.sflag [#allocation3], %s1279
        %s1281 = sand.u32 %s225, 1
        %s1282 = smul.addr %s1281, 8
        %s1283 = scalar_lea.vmem [#allocation2], %s1282
        // Predicated region
        $region57: #{tpu_custom_call.1} parent=55 // pred_check
          %p1284 = pneg %p235
        $region58: #{tpu_custom_call.1} parent=55 // pred_check_branch
          %1286 = sbr.rel (%p1284) target = $region60
        $region59: #{tpu_custom_call.1} parent=55 // pred_region
          %s1287 = smul.u32 2, %s23
          %1289 = vsyncadd %s1280, 0
          %s1290 = smul.addr %s1287, 4
          %s1291 = scalar_lea.hbm %s9, %s1290
          %s1293 = sshll.u32 %s1283, 4
          %s1294 = int_to_ptr.vmem [resolvable:$true] %s1293
          %s1295 = sshll.u32 %s1291, 4
          %s1296 = int_to_ptr.hbm [resolvable:$true] %s1295
          %1298 = dma.vmem_to_hbm [thread:$0]  %s1294, 128, %s1296, %s1280
        $region60: #{tpu_custom_call.1} parent=55 // pred_fallthru
          _
      $region56: #{tpu_custom_call.1} parent=5 // pred_fallthru
        _
      %p1299 = scmp.le.s32.totalorder 2, %s18
      // Predicated region
      $region61: #{tpu_custom_call.1} parent=5 // pred_check
        %p1300 = pneg %p1299
      $region62: #{tpu_custom_call.1} parent=5 // pred_check_branch
        %1302 = sbr.rel (%p1300) target = $region64
      $region63: #{tpu_custom_call.1} parent=5 // pred_region
        %s1303 = ssub.s32 %s18, 2
        // Predicated region
        $region65: #{tpu_custom_call.1} parent=63 // pred_check
          %p1304 = pneg %p241
        $region66: #{tpu_custom_call.1} parent=63 // pred_check_branch
          %1306 = sbr.rel (%p1304) target = $region68
        $region67: #{tpu_custom_call.1} parent=63 // pred_region
          %s1307 = sand.u32 %s226, 1
          %s1308 = scalar_lea.sflag [#allocation3], %s1307
          %s1309 = sand.u32 %s226, 1
          %s1310 = smul.addr %s1309, 8
          %s1311 = scalar_lea.vmem [#allocation2], %s1310
          %1313 = dma.done %s1308, 128
        $region68: #{tpu_custom_call.1} parent=63 // pred_fallthru
          _
      $region64: #{tpu_custom_call.1} parent=5 // pred_fallthru
        _
    $region6: #{tpu_custom_call.1} parent=1 // loop_footer
      %s22 = sadd.s32 1, %s18
    $region7: #{tpu_custom_call.1} parent=1 // loop_footer_branch
      %17 = sbr.rel target = $region3
    $region8: #{tpu_custom_call.1} parent=1 // loop_exit
      _
    %1314 = vsyncpa [#allocation3], 1
    %s1315 = scalar_lea.sflag [#allocation3], 1
    %1316 = vsyncpa %s1315, 1

</llo_original>
